<compile_context>
chip_gen: v7x
topology: tpu7x:2x2x1
jax: 0.10.0
libtpu: 0.0.40
codegen_flags: <defaults>
</compile_context>

<pallas_src>
import math

import jax
import jax.numpy as jnp
from jax.experimental import pallas as pl
from jax.experimental.pallas import tpu as pltpu

LATENT_DIM = 16
FEATURE_DIM = 32
BATCH = 8

# ~1 MiB f32 x-tile; big enough to amortize per-step overhead on every chip
# generation while staying trivially double-bufferable in VMEM (incl. v7x).
DEFAULT_BLOCK_M = 8192

# At large batch keep at least this many grid steps so the single "parallel"
# grid axis can be split across v7x's two TensorCores.
MIN_GRID_STEPS = 16


def _round_up(x, m):
    return ((x + m - 1) // m) * m


def _pick_tile(batch, block_m):
    """Pick a batch tile: <= block_m, multiple of 8, >= MIN_GRID_STEPS steps
    at large batch, and balanced so padding is at most a few rows."""
    n_steps = max(pl.cdiv(batch, block_m), min(MIN_GRID_STEPS, pl.cdiv(batch, 8)))
    n_steps = max(n_steps, 1)
    tm = _round_up(pl.cdiv(batch, n_steps), 8)
    return min(tm, _round_up(batch, 8))


def exp_layer_kernel(x_ref, w_ref, b_ref, mu_ref, covar_ref):
    L = w_ref.shape[1] // 2

    x = x_ref[...]                                   # (TM, F)  f32
    w = w_ref[...]                                   # (F, 2L)  f32, VMEM-resident
    b = b_ref[...]                                   # (1, 2L)  f32, VMEM-resident

    # Linear (MXU): y = x @ w + b, f32 accumulation.
    y = jnp.dot(x, w, preferred_element_type=jnp.float32) + b   # (TM, 2L)

    mu_raw = y[:, :L]                                # (TM, L)
    covar_raw = y[:, L:]                             # (TM, L)

    # geoopt Lorentz.expmap0 with k=1 on u = [0, mu_raw] (left zero-pad):
    # the Lorentzian norm of u reduces to the Euclidean norm of mu_raw,
    # clamped at 1e-8 (geoopt clamps the norm, not the squared norm).
    #   mu[:, 0]  = cosh(||u||)
    #   mu[:, 1:] = sinh(||u||) / ||u|| * mu_raw
    sqn = jnp.sum(mu_raw * mu_raw, axis=-1, keepdims=True)      # (TM, 1)
    nrm = jnp.maximum(jnp.sqrt(sqn), 1e-8)
    e_pos = jnp.exp(nrm)
    e_neg = jnp.exp(-nrm)
    cosh_col = 0.5 * (e_pos + e_neg)                             # (TM, 1)
    sinh_over_n = 0.5 * (e_pos - e_neg) / nrm                    # (TM, 1)

    # Single lane-contiguous (TM, L+1) mu block: [cosh | sinh(n)/n * mu_raw].
    mu_ref[...] = jnp.concatenate([cosh_col, sinh_over_n * mu_raw], axis=-1)

    # softplus(x) = max(x, 0) + log1p(exp(-|x|))  (stable, matches F.softplus).
    covar_ref[...] = jnp.maximum(covar_raw, 0.0) + jnp.log1p(
        jnp.exp(-jnp.abs(covar_raw)))


def exp_layer(feature, w_t, b_row, *, block_m=DEFAULT_BLOCK_M):
    """feature: (B, F) f32; w_t: (F, 2L) f32; b_row: (1, 2L) f32."""
    B, F = feature.shape
    L = w_t.shape[1] // 2

    tm = _pick_tile(B, block_m)
    b_pad = _round_up(B, tm)
    if b_pad != B:
        # Rare (tile picker balances tm so this is at most a few rows); the
        # demo B=8 path never pads.
        feature = jnp.pad(feature, ((0, b_pad - B), (0, 0)))

    # TODO(synk): if the surrounding model can feed bf16 activations, stream
    # feature/w_t as bf16 (bf16 x bf16 -> f32 on the MXU, elementwise math in
    # f32) to halve HBM traffic — the kernel is bandwidth-bound at large B.
    mu, covar = pl.pallas_call(
        exp_layer_kernel,
        grid=(b_pad // tm,),
        out_shape=(
            jax.ShapeDtypeStruct((b_pad, L + 1), jnp.float32),
            jax.ShapeDtypeStruct((b_pad, L), jnp.float32),
        ),
        in_specs=[
            # Streamed over batch.
            pl.BlockSpec((tm, F), lambda i: (i, 0)),
            # Weight / bias: constant block index -> stay resident in VMEM.
            pl.BlockSpec((F, 2 * L), lambda i: (0, 0)),
            pl.BlockSpec((1, 2 * L), lambda i: (0, 0)),
        ],
        out_specs=(
            pl.BlockSpec((tm, L + 1), lambda i: (i, 0)),
            pl.BlockSpec((tm, L), lambda i: (i, 0)),
        ),
        compiler_params=pltpu.CompilerParams(
            dimension_semantics=("parallel",)),
    )(feature, w_t, b_row)

    if b_pad != B:
        mu, covar = mu[:B], covar[:B]
    return mu, covar


def _reference(feature, w, b):
    """Pure-JAX reference mirroring the PyTorch / geoopt semantics."""
    y = feature @ w.T + b
    mu_raw, covar_raw = y[:, :LATENT_DIM], y[:, LATENT_DIM:]
    nrm = jnp.maximum(
        jnp.sqrt(jnp.sum(mu_raw**2, -1, keepdims=True)), 1e-8)
    mu = jnp.concatenate(
        [jnp.cosh(nrm), jnp.sinh(nrm) / nrm * mu_raw], axis=-1)
    covar = jax.nn.softplus(covar_raw)
    return mu, covar


if __name__ == "__main__":
    key = jax.random.PRNGKey(0)
    k_x, k_w, k_b = jax.random.split(key, 3)

    # Deterministic "checkpoint": nn.Linear-style uniform init.
    bound = 1.0 / math.sqrt(FEATURE_DIM)
    w = jax.random.uniform(
        k_w, (2 * LATENT_DIM, FEATURE_DIM), jnp.float32, -bound, bound)
    b = jax.random.uniform(
        k_b, (2 * LATENT_DIM,), jnp.float32, -bound, bound)

    feature = jax.random.normal(k_x, (BATCH, FEATURE_DIM), jnp.float32)

    mu, covar = exp_layer(feature, w.T, b.reshape(1, -1))
    jax.block_until_ready((mu, covar))

    mu_ref, covar_ref = _reference(feature, w, b)
    assert mu.shape == (BATCH, LATENT_DIM + 1)
    assert covar.shape == (BATCH, LATENT_DIM)
    assert jnp.allclose(mu, mu_ref, rtol=1e-5, atol=1e-5)
    assert jnp.allclose(covar, covar_ref, rtol=1e-5, atol=1e-5)

    # TODO(synk): at the demo shape (B=8, grid=1) launch + DMA fixed cost
    # dominates; in the real model fuse this expmap0/softplus epilogue into
    # the producing matmul kernel's store path instead of a standalone call.

    print("KERNEL_OK")
</pallas_src>

<mosaic_0001>
module attributes {stable_mosaic.version = 11 : i64} {
  func.func @exp_layer_kernel(%arg0: i32, %arg1: memref<8x32xf32, #tpu.memory_space<vmem>>, %arg2: memref<32x32xf32, #tpu.memory_space<vmem>>, %arg3: memref<1x32xf32, #tpu.memory_space<vmem>>, %arg4: memref<8x17xf32, #tpu.memory_space<vmem>>, %arg5: memref<8x16xf32, #tpu.memory_space<vmem>>) attributes {dimension_semantics = [#tpu.dimension_semantics<parallel>], iteration_bounds = array<i64: 1>, scalar_prefetch = 0 : i64, scratch_operands = 0 : i64, tpu.core_type = #tpu.core_type<tc>, window_params = [{transform_indices = @transform_0, window_bounds = array<i64: 8, 32>}, {pipeline_mode = #tpu.pipeline_mode<synchronous>, transform_indices = @transform_1, window_bounds = array<i64: 32, 32>}, {pipeline_mode = #tpu.pipeline_mode<synchronous>, transform_indices = @transform_2, window_bounds = array<i64: 1, 32>}, {transform_indices = @transform_3, window_bounds = array<i64: 8, 17>}, {transform_indices = @transform_4, window_bounds = array<i64: 8, 16>}]} {
    %c0 = arith.constant 0 : index
    %c0_0 = arith.constant 0 : index
    %0 = vector.load %arg1[%c0, %c0_0] : memref<8x32xf32, #tpu.memory_space<vmem>>, vector<8x32xf32>
    %c0_1 = arith.constant 0 : index
    %c0_2 = arith.constant 0 : index
    %1 = vector.load %arg2[%c0_1, %c0_2] : memref<32x32xf32, #tpu.memory_space<vmem>>, vector<32x32xf32>
    %c0_3 = arith.constant 0 : index
    %c0_4 = arith.constant 0 : index
    %2 = vector.load %arg3[%c0_3, %c0_4] : memref<1x32xf32, #tpu.memory_space<vmem>>, vector<1x32xf32>
    %cst = arith.constant dense<0.000000e+00> : vector<8x32xf32>
    %3 = tpu.matmul %0, %1, %cst {dimension_numbers = #tpu.dot_dimension_numbers<[1], [0], [0], [1], [0, 0, 1, 1], [], []>} : vector<8x32xf32>, vector<32x32xf32>, vector<8x32xf32> -> vector<8x32xf32>
    %4 = vector.broadcast %2 : vector<1x32xf32> to vector<8x32xf32>
    %5 = arith.addf %3, %4 : vector<8x32xf32>
    %6 = vector.extract_strided_slice %5 {offsets = [0, 0], sizes = [8, 16], strides = [1, 1]} : vector<8x32xf32> to vector<8x16xf32>
    %7 = vector.extract_strided_slice %5 {offsets = [0, 16], sizes = [8, 16], strides = [1, 1]} : vector<8x32xf32> to vector<8x16xf32>
    %8 = arith.mulf %6, %6 : vector<8x16xf32>
    %cst_5 = arith.constant dense<0.000000e+00> : vector<8xf32>
    %9 = vector.multi_reduction <add>, %8, %cst_5 [1] : vector<8x16xf32> to vector<8xf32>
    %10 = vector.shape_cast %9 : vector<8xf32> to vector<8x1xf32>
    %11 = math.sqrt %10 : vector<8x1xf32>
    %cst_6 = arith.constant 9.99999993E-9 : f32
    %12 = vector.broadcast %cst_6 : f32 to vector<8x1xf32>
    %13 = arith.maximumf %11, %12 : vector<8x1xf32>
    %14 = math.exp %13 : vector<8x1xf32>
    %cst_7 = arith.constant 0.000000e+00 : f32
    %15 = vector.broadcast %cst_7 : f32 to vector<8x1xf32>
    %16 = arith.subf %15, %13 : vector<8x1xf32>
    %17 = math.exp %16 : vector<8x1xf32>
    %18 = arith.addf %14, %17 : vector<8x1xf32>
    %cst_8 = arith.constant 5.000000e-01 : f32
    %19 = vector.broadcast %cst_8 : f32 to vector<8x1xf32>
    %20 = arith.mulf %19, %18 : vector<8x1xf32>
    %21 = arith.subf %14, %17 : vector<8x1xf32>
    %cst_9 = arith.constant 5.000000e-01 : f32
    %22 = vector.broadcast %cst_9 : f32 to vector<8x1xf32>
    %23 = arith.mulf %22, %21 : vector<8x1xf32>
    %24 = arith.divf %23, %13 : vector<8x1xf32>
    %25 = vector.broadcast %24 : vector<8x1xf32> to vector<8x16xf32>
    %26 = arith.mulf %25, %6 : vector<8x16xf32>
    %27 = tpu.concatenate %20, %26 in 1 : vector<8x1xf32>, vector<8x16xf32> -> vector<8x17xf32>
    %c0_10 = arith.constant 0 : index
    %c0_11 = arith.constant 0 : index
    %28 = vector.load %arg4[%c0_10, %c0_11] : memref<8x17xf32, #tpu.memory_space<vmem>>, vector<8x17xf32>
    tpu.vector_store %arg4[%c0_10, %c0_11], %27 {strides = array<i32>} : memref<8x17xf32, #tpu.memory_space<vmem>>, vector<8x17xf32>,
    %cst_12 = arith.constant 0.000000e+00 : f32
    %29 = vector.broadcast %cst_12 : f32 to vector<8x16xf32>
    %30 = arith.maximumf %7, %29 : vector<8x16xf32>
    %31 = math.absf %7 : vector<8x16xf32>
    %cst_13 = arith.constant 0.000000e+00 : f32
    %32 = vector.broadcast %cst_13 : f32 to vector<8x16xf32>
    %33 = arith.subf %32, %31 : vector<8x16xf32>
    %34 = math.exp %33 : vector<8x16xf32>
    %35 = math.log1p %34 : vector<8x16xf32>
    %36 = arith.addf %30, %35 : vector<8x16xf32>
    %c0_14 = arith.constant 0 : index
    %c0_15 = arith.constant 0 : index
    %37 = vector.load %arg5[%c0_14, %c0_15] : memref<8x16xf32, #tpu.memory_space<vmem>>, vector<8x16xf32>
    tpu.vector_store %arg5[%c0_14, %c0_15], %36 {strides = array<i32>} : memref<8x16xf32, #tpu.memory_space<vmem>>, vector<8x16xf32>,
    return
  }
  func.func @transform_0(%arg0: i32) -> (i32, i32) {
    %c0_i32 = arith.constant 0 : i32
    %c0_i32_0 = arith.constant 0 : i32
    return %arg0, %c0_i32 : i32, i32
  }
  func.func @transform_1(%arg0: i32) -> (i32, i32) {
    %c0_i32 = arith.constant 0 : i32
    %c0_i32_0 = arith.constant 0 : i32
    %c0_i32_1 = arith.constant 0 : i32
    return %c0_i32, %c0_i32_0 : i32, i32
  }
  func.func @transform_2(%arg0: i32) -> (i32, i32) {
    %c0_i32 = arith.constant 0 : i32
    %c0_i32_0 = arith.constant 0 : i32
    %c0_i32_1 = arith.constant 0 : i32
    return %c0_i32, %c0_i32_0 : i32, i32
  }
  func.func @transform_3(%arg0: i32) -> (i32, i32) {
    %c0_i32 = arith.constant 0 : i32
    %c0_i32_0 = arith.constant 0 : i32
    return %arg0, %c0_i32 : i32, i32
  }
  func.func @transform_4(%arg0: i32) -> (i32, i32) {
    %c0_i32 = arith.constant 0 : i32
    %c0_i32_0 = arith.constant 0 : i32
    return %arg0, %c0_i32 : i32, i32
  }
}

</mosaic_0001>

<llo_original>
// kernel: tpu_custom_call.1
$region0: #{tpu_custom_call.1}
  #allocation0 [shape = 'u32[]', space=smem, size = 0x4, offset = 0x4, fixed_abs, tag = 'smem constant byte address 0x4 - core index']
  #allocation1 [shape = 'u32[144,128]{1,0:T(1,128)}', space=vmem, size = 0x12000, scoped, tag = 'internal scratch']
  %s0 = inlined_call_operand.hbm [shape: f32[8,32], index: 0, kind: input, shape index: {}]
  %s1 = inlined_call_operand.hbm [shape: f32[32,32], index: 1, kind: input, shape index: {}]
  %s2 = inlined_call_operand.vmem [shape: f32[1,32], index: 2, kind: input, shape index: {}]
  %s3 = inlined_call_operand.hbm [shape: f32[8,17], index: 3, kind: output, shape index: {0}]
  %s4 = inlined_call_operand.hbm [shape: f32[8,16], index: 4, kind: output, shape index: {1}]
  %5 = xla_tuple %s3, %s4
  %s6 = sld [smem:[#allocation0]]
  $region38: #{tpu_custom_call.1} parent=0
    _
  %s8 = ssub.s32 1, %s6
  %s9 = scalar_select 0, %s8, %s6
  $region1: #{tpu_custom_call.1} parent=0
    #allocation2 [shape = 'u8[4096]{0}', space=vmem, size = 0x1000, scoped, tag = 'input window, operand 0, single buffered']
    #allocation3 [shape = 's32[1]{0}', space=sflag, size = 0x4, scoped, tag = 'scoped memory for tpu_custom_call.1']
    #allocation4 [shape = 's32[1]{0}', space=sflag, size = 0x4, scoped, tag = 'scoped memory for tpu_custom_call.1']
    #allocation5 [shape = 'u8[16384]{0}', space=vmem, size = 0x4000, scoped, tag = 'input window, operand 1, single buffered']
    #allocation6 [shape = 's32[1]{0}', space=sflag, size = 0x4, scoped, tag = 'scoped memory for tpu_custom_call.1']
    #allocation7 [shape = 'u8[4096]{0}', space=vmem, size = 0x1000, scoped, tag = 'output window, operand 0, single buffered']
    #allocation8 [shape = 'u8[4096]{0}', space=vmem, size = 0x1000, scoped, tag = 'output window, operand 1, single buffered']
    #allocation9 [shape = 's32[1]{0}', space=sflag, size = 0x4, scoped, tag = 'scoped memory for tpu_custom_call.1']
    %10 = vsyncpa [#allocation3], 0
    %11 = vsyncpa [#allocation6], 0
    %12 = vsyncpa [#allocation4], 0
    %13 = vsyncpa [#allocation9], 0
    // Predicated region
    $region2: #{tpu_custom_call.1} parent=1 // pred_check
      _
    $region3: #{tpu_custom_call.1} parent=1 // pred_check_branch
      %15 = sbr.rel (0) target = $region5
    $region4: #{tpu_custom_call.1} parent=1 // pred_region
      %s17 = ssub.s32 128, 128
      %18 = vsyncadd [#allocation3], %s17
      %s20 = sshll.u32 [#allocation2], 4
      %s21 = int_to_ptr.vmem [resolvable:$true] %s20
      %23 = dma.hbm_to_vmem [thread:$0]  %s0, 128, %s21, [#allocation3]
    $region5: #{tpu_custom_call.1} parent=1 // pred_fallthru
      _
    // Predicated region
    $region6: #{tpu_custom_call.1} parent=1 // pred_check
      _
    $region7: #{tpu_custom_call.1} parent=1 // pred_check_branch
      %25 = sbr.rel (0) target = $region9
    $region8: #{tpu_custom_call.1} parent=1 // pred_region
      %s27 = ssub.s32 512, 512
      %28 = vsyncadd [#allocation6], %s27
      %s29 = sshll.u32 [#allocation5], 4
      %s30 = int_to_ptr.vmem [resolvable:$true] %s29
      %35 = dma.hbm_to_vmem [thread:$0]  %s1, 512, %s30, [#allocation6], 128, 128, 8
    $region9: #{tpu_custom_call.1} parent=1 // pred_fallthru
      _
    // Predicated region
    $region10: #{tpu_custom_call.1} parent=1 // pred_check
      _
    $region11: #{tpu_custom_call.1} parent=1 // pred_check_branch
      %37 = sbr.rel (0) target = $region13
    $region12: #{tpu_custom_call.1} parent=1 // pred_region
      _
    $region13: #{tpu_custom_call.1} parent=1 // pred_fallthru
      _
    // Predicated region
    $region14: #{tpu_custom_call.1} parent=1 // pred_check
      _
    $region15: #{tpu_custom_call.1} parent=1 // pred_check_branch
      %39 = sbr.rel (0) target = $region17
    $region16: #{tpu_custom_call.1} parent=1 // pred_region
      %40 = dma.done [#allocation3], 128
    $region17: #{tpu_custom_call.1} parent=1 // pred_fallthru
      _
    // Predicated region
    $region18: #{tpu_custom_call.1} parent=1 // pred_check
      _
    $region19: #{tpu_custom_call.1} parent=1 // pred_check_branch
      %42 = sbr.rel (0) target = $region21
    $region20: #{tpu_custom_call.1} parent=1 // pred_region
      %43 = dma.done [#allocation6], 512
    $region21: #{tpu_custom_call.1} parent=1 // pred_fallthru
      _
    %v44 = vld [vmem:[#allocation2] sm:$0xff]
    %v45 = vld [vmem:[#allocation5] sm:$0xff]
    %v46 = vld [vmem:[#allocation5 + $0x8] sm:$0xff]
    %v47 = vld [vmem:[#allocation5 + $0x10] sm:$0xff]
    %v48 = vld [vmem:[#allocation5 + $0x18] sm:$0xff]
    %v49 = vld [vmem:[%s2] sm:$0x1]
    %v51 = vlaneseq
    %v52 = vshrl.u32 %v51, 7
    %v53 = vsub.s32 0, %v52
    %v54 = vrot.slane %v49, %v53
    %vm56 = vcmask 261120
    %v58 = vsel %vm56, %v44, 0
    %60 = vmatprep.subr.mxu0 0.0
    %61 = vmatpush1.msra.mxu0 %v45
    %62 = vmatprep.subr.mxu0 0.0
    %63 = vmatpush1.msra.mxu0 %v46
    %64 = vmatprep.subr.mxu0 0.0
    %65 = vmatpush1.msra.mxu0 %v47
    %66 = vmatprep.subr.mxu0 0.0
    %67 = vmatpush1.msra.mxu0 %v48
    %68 = vmatprep.subr.mxu0 0.0
    %69 = vmatpush1.msra.mxu0 0.0
    %70 = vmatprep.subr.mxu0 0.0
    %71 = vmatpush1.msra.mxu0 0.0
    %72 = vmatprep.subr.mxu0 0.0
    %73 = vmatpush1.msra.mxu0 0.0
    %74 = vmatprep.subr.mxu0 0.0
    %75 = vmatpush1.msra.mxu0 0.0
    %76 = vmatprep.subr.mxu0 0.0
    %77 = vmatpush1.msra.mxu0 0.0
    %78 = vmatprep.subr.mxu0 0.0
    %79 = vmatpush1.msra.mxu0 0.0
    %80 = vmatprep.subr.mxu0 0.0
    %81 = vmatpush1.msra.mxu0 0.0
    %82 = vmatprep.subr.mxu0 0.0
    %83 = vmatpush1.msra.mxu0 0.0
    %84 = vmatprep.subr.mxu0 0.0
    %85 = vmatpush1.msra.mxu0 0.0
    %86 = vmatprep.subr.mxu0 0.0
    %87 = vmatpush1.msra.mxu0 0.0
    %88 = vmatprep.subr.mxu0 0.0
    %89 = vmatpush1.msra.mxu0 0.0
    %90 = vmatprep.subr.mxu0 0.0
    %91 = vmatpush1.msra.mxu0 0.0
    %92 = vmatprep.subr.mxu0 0.0
    %93 = vmatpush1.msra.mxu0 0.0
    %94 = vmatprep.subr.mxu0 0.0
    %95 = vmatpush1.msra.mxu0 0.0
    %96 = vmatprep.subr.mxu0 0.0
    %97 = vmatpush1.msra.mxu0 0.0
    %98 = vmatprep.subr.mxu0 0.0
    %99 = vmatpush1.msra.mxu0 0.0
    %100 = vmatprep.subr.mxu0 0.0
    %101 = vmatpush1.msra.mxu0 0.0
    %102 = vmatprep.subr.mxu0 0.0
    %103 = vmatpush1.msra.mxu0 0.0
    %104 = vmatprep.subr.mxu0 0.0
    %105 = vmatpush1.msra.mxu0 0.0
    %106 = vmatprep.subr.mxu0 0.0
    %107 = vmatpush1.msra.mxu0 0.0
    %108 = vmatprep.subr.mxu0 0.0
    %109 = vmatpush1.msra.mxu0 0.0
    %110 = vmatprep.subr.mxu0 0.0
    %111 = vmatpush1.msra.mxu0 0.0
    %112 = vmatprep.subr.mxu0 0.0
    %113 = vmatpush1.msra.mxu0 0.0
    %114 = vmatprep.subr.mxu0 0.0
    %115 = vmatpush1.msra.mxu0 0.0
    %116 = vmatprep.subr.mxu0 0.0
    %117 = vmatpush1.msra.mxu0 0.0
    %118 = vmatprep.subr.mxu0 0.0
    %119 = vmatpush1.msra.mxu0 0.0
    %120 = vmatprep.subr.mxu0 0.0
    %121 = vmatpush1.msra.mxu0 0.0
    %122 = vmatprep.subr.mxu0 0.0
    %123 = vmatpush1.msra.mxu0 0.0
    %124 = vmatprep.mubr.f32.mxu0 0.0
    %125 = vmatmul.mubr.f32.gmra.mrb[0].mxu0 %v58
    %v126 = vpop.f32.mrb[0].mxu0
    %v127 = vadd.f32 %v54, %v126
    %v128 = vpop.f32.mrb[0].mxu0
    %129 = vdwg.mxu0
    %v130 = vmul.f32 %v127, %v127
    %vm131 = vcmask 130048
    %v132 = vsel %vm131, %v130, 0.0
    %133 = vadd.xlane.f32.xlu0 %v132
    %v134 = vpop.xlane.xlu0 %133
    %v135 = vrsqrt.pop %v134
    %v136 = vmul.f32 %v134, %v135
    %vm137 = vcmp.eq.f32.partialorder %v134, inf
    %v138 = vsel %vm137, %v134, %v136
    %vm139 = vcmp.eq.f32.partialorder %v134, 0.0
    %v140 = vand.u32 %v134, 2147483648
    %v141 = vsel %vm139, %v140, %v138
    %v142 = vmax.f32 %v141, 1e-08
    %v143 = vmul.f32 %v142, 1.442695
    %v144 = vpow.pop %v143
    %v145 = vsub.f32 0.0, %v142
    %v146 = vmul.f32 %v145, 1.442695
    %v147 = vpow.pop %v146
    %v148 = vadd.f32 %v144, %v147
    %v149 = vmul.f32 %v148, 0.5
    %v150 = vsub.f32 %v144, %v147
    %v151 = vmul.f32 %v150, 0.5
    %v152 = vrcp.pop %v142
    %v153 = vmul.f32 %v151, %v152
    %v154 = vmul.f32 %v153, %v127
    %156 = vrot.lane.b32.xlu0 %v154, 1
    %v157 = vpop.permute.xlu0 %156
    %vm159 = vcmask 7168
    %v160 = vsel %vm159, %v149, %v157
    %vm161 = vcmask 138240
    %162 = vst.msk [vmem:[#allocation7] sm:$0xff] %vm161, %v160
    %v163 = vmax.f32 %v127, 0.0
    %v164 = vand.u32 2147483647, %v127
    %v165 = vsub.f32 0.0, %v164
    %v166 = vmul.f32 %v165, 1.442695
    %v167 = vpow.pop %v166
    %v168 = vadd.f32 %v167, 1.0
    %v169 = vlog2.pop %v168
    %v170 = vmul.f32 %v169, 0.6931472
    %v171 = vmul.f32 -0.5, %v167
    %v172 = vadd.f32 %v171, 1.0
    %v173 = vmul.f32 %v172, %v167
    %v174 = vand.u32 2147483647, %v167
    %vm175 = vcmp.lt.f32.partialorder %v174, 0.0004427343
    %v176 = vsel %vm175, %v173, %v170
    %v177 = vadd.f32 %v163, %v176
    %179 = vrot.lane.b32.xlu0 %v177, 112
    %v180 = vpop.permute.xlu0 %179
    %182 = vst.msk [vmem:[#allocation8] sm:$0xff] %vm131, %v180
    // Predicated region
    $region22: #{tpu_custom_call.1} parent=1 // pred_check
      _
    $region23: #{tpu_custom_call.1} parent=1 // pred_check_branch
      %184 = sbr.rel (0) target = $region25
    $region24: #{tpu_custom_call.1} parent=1 // pred_region
      %s186 = ssub.s32 128, 128
      %187 = vsyncadd [#allocation4], %s186
      %s189 = sshll.u32 [#allocation7], 4
      %s190 = int_to_ptr.vmem [resolvable:$true] %s189
      %192 = dma.vmem_to_hbm [thread:$0]  %s190, 128, %s3, [#allocation4]
    $region25: #{tpu_custom_call.1} parent=1 // pred_fallthru
      _
    // Predicated region
    $region26: #{tpu_custom_call.1} parent=1 // pred_check
      _
    $region27: #{tpu_custom_call.1} parent=1 // pred_check_branch
      %194 = sbr.rel (0) target = $region29
    $region28: #{tpu_custom_call.1} parent=1 // pred_region
      %s196 = ssub.s32 128, 128
      %197 = vsyncadd [#allocation9], %s196
      %s199 = sshll.u32 [#allocation8], 4
      %s200 = int_to_ptr.vmem [resolvable:$true] %s199
      %202 = dma.vmem_to_hbm [thread:$0]  %s200, 128, %s4, [#allocation9]
    $region29: #{tpu_custom_call.1} parent=1 // pred_fallthru
      _
    // Predicated region
    $region30: #{tpu_custom_call.1} parent=1 // pred_check
      _
    $region31: #{tpu_custom_call.1} parent=1 // pred_check_branch
      %204 = sbr.rel (0) target = $region33
    $region32: #{tpu_custom_call.1} parent=1 // pred_region
      %205 = dma.done [#allocation4], 128
    $region33: #{tpu_custom_call.1} parent=1 // pred_fallthru
      _
    // Predicated region
    $region34: #{tpu_custom_call.1} parent=1 // pred_check
      _
    $region35: #{tpu_custom_call.1} parent=1 // pred_check_branch
      %207 = sbr.rel (0) target = $region37
    $region36: #{tpu_custom_call.1} parent=1 // pred_region
      %208 = dma.done [#allocation9], 128
    $region37: #{tpu_custom_call.1} parent=1 // pred_fallthru
      _
    %209 = vsyncpa [#allocation3], 1
    %210 = vsyncpa [#allocation6], 1
    %211 = vsyncpa [#allocation4], 1
    %212 = vsyncpa [#allocation9], 1

</llo_original>
